<compile_context>
chip_gen: v7x
topology: tpu7x:2x2x1
jax: 0.10.0
libtpu: 0.0.40
codegen_flags: <defaults>
</compile_context>

<pallas_src>
import functools

import jax
import jax.numpy as jnp
from jax.experimental import pallas as pl
from jax.experimental.pallas import tpu as pltpu


def _gru_recurrence_kernel(gir_ref,   # (S, H) f32  precomputed gi for gate r (incl. b_ih_r)
                           giz_ref,   # (S, H) f32  precomputed gi for gate z
                           gin_ref,   # (S, H) f32  precomputed gi for gate n
                           h0_ref,    # (1, H) f32  initial hidden
                           whh_ref,   # (3, H, H)   gate-major W_hh^T (storage dtype)
                           bhh_ref,   # (3, H) f32  gate-major b_hh
                           out_ref,   # (S, H)      per-step GRU outputs
                           hN_ref,    # (1, H) f32  final hidden state
                           *, unroll):
    S = gir_ref.shape[0]
    wdt = whh_ref.dtype

    def step(i, h):
        # Per-gate input projections for this step (precomputed outside the kernel).
        gi_r = gir_ref[pl.ds(i, 1), :]                       # (1, H)
        gi_z = giz_ref[pl.ds(i, 1), :]
        gi_n = gin_ref[pl.ds(i, 1), :]

        # Recurrent projections on the MXU, f32 accumulation. Gate-major weights
        # avoid mid-lane column slicing of a fused (1, 3H) result.
        hw = h.astype(wdt)
        gh_r = jnp.dot(hw, whh_ref[0], preferred_element_type=jnp.float32) + bhh_ref[0:1, :]
        gh_z = jnp.dot(hw, whh_ref[1], preferred_element_type=jnp.float32) + bhh_ref[1:2, :]
        gh_n = jnp.dot(hw, whh_ref[2], preferred_element_type=jnp.float32) + bhh_ref[2:3, :]

        r = jax.nn.sigmoid(gi_r + gh_r)
        z = jax.nn.sigmoid(gi_z + gh_z)
        n = jnp.tanh(gi_n + r * gh_n)        # b_hh_n stays inside r*(...): PyTorch GRU semantics
        h_new = (1.0 - z) * n + z * h

        # Store within VMEM; the whole (S, H) slab is written back to HBM once at the end.
        out_ref[pl.ds(i, 1), :] = h_new.astype(out_ref.dtype)
        return h_new

    h_last = jax.lax.fori_loop(0, S, step, h0_ref[...].astype(jnp.float32), unroll=unroll)
    hN_ref[...] = h_last


def prepare_params(raw, dtype=jnp.float32):
    """One-time parameter prep (hoisted out of the decode loop).

    raw: PyTorch-layout params {embedding (V,H), w_ih (3H,H), w_hh (3H,H), b_ih (3H,), b_hh (3H,)}.
    dtype: storage dtype for embedding/weights (use jnp.bfloat16 at production sizes).
    """
    H = raw["w_hh"].shape[1]
    return {
        "embedding": raw["embedding"].astype(dtype),                                   # (V, H)
        "w_ih_t": raw["w_ih"].T.astype(dtype),                                         # (H, 3H)
        "b_ih": raw["b_ih"].astype(jnp.float32),                                       # (3H,)
        "w_hh_g": raw["w_hh"].reshape(3, H, H).transpose(0, 2, 1).astype(dtype),       # (3,H,H), [g] = W_hh_g^T
        "b_hh_g": raw["b_hh"].reshape(3, H).astype(jnp.float32),                       # (3, H)
    }


@functools.partial(jax.jit, static_argnames=("unroll",))
def encoder_gru_seq(tokens, hidden, params, unroll=True):
    """Run the GRU over a token sequence; the recurrence is one pallas_call.

    tokens: (S,) int32; hidden: (1, 1, H) f32.
    Returns (outputs (S, 1, H) f32, new_hidden (1, 1, H) f32).
    """
    emb = params["embedding"]
    wih_t = params["w_ih_t"]
    whh_g = params["w_hh_g"]
    b_ih = params["b_ih"]
    b_hh = params["b_hh_g"]
    V, H = emb.shape
    S = int(tokens.shape[0])

    toks = jnp.clip(tokens.astype(jnp.int32).reshape(S), 0, V - 1)    # OOB-safe gather

    # ---- Non-recurrent half, hoisted off the serial critical path (XLA, full-MXU) ----
    x = jnp.take(emb, toks, axis=0)                                          # (S, H)
    gi = jnp.dot(x, wih_t, preferred_element_type=jnp.float32) + b_ih        # (S, 3H) f32
    gi_r = gi[:, 0 * H:1 * H]
    gi_z = gi[:, 1 * H:2 * H]
    gi_n = gi[:, 2 * H:3 * H]

    h0 = hidden.reshape(1, H).astype(jnp.float32)

    # VMEM budget sized to actual residency (+2x headroom), capped under v7x's 64 MiB.
    itemw = jnp.dtype(whh_g.dtype).itemsize
    resident_bytes = (3 * S * H * 4            # gi_r / gi_z / gi_n (f32)
                      + 3 * H * H * itemw      # W_hh gate-major
                      + 3 * H * 4 + H * 4      # b_hh + h0
                      + S * H * 4 + H * 4)     # outputs + final hidden
    vmem_limit = int(min(64 * 1024 * 1024,
                         max(2 * resident_bytes + (1 << 20), 4 * 1024 * 1024)))

    kernel = functools.partial(_gru_recurrence_kernel, unroll=unroll)

    out, h_n = pl.pallas_call(
        kernel,
        grid=(1,),   # whole recurrence in one invocation: no per-step pipeline overhead
        in_specs=[
            pl.BlockSpec((S, H), lambda i: (0, 0)),        # gi_r
            pl.BlockSpec((S, H), lambda i: (0, 0)),        # gi_z
            pl.BlockSpec((S, H), lambda i: (0, 0)),        # gi_n
            pl.BlockSpec((1, H), lambda i: (0, 0)),        # h0
            pl.BlockSpec((3, H, H), lambda i: (0, 0, 0)),  # W_hh^T gate-major
            pl.BlockSpec((3, H), lambda i: (0, 0)),        # b_hh gate-major
        ],
        out_specs=[
            pl.BlockSpec((S, H), lambda i: (0, 0)),        # outputs (single slab writeback)
            pl.BlockSpec((1, H), lambda i: (0, 0)),        # final hidden (f32)
        ],
        out_shape=[
            jax.ShapeDtypeStruct((S, H), jnp.float32),     # bf16 is fine at prod sizes
            jax.ShapeDtypeStruct((1, H), jnp.float32),
        ],
        compiler_params=pltpu.CompilerParams(
            dimension_semantics=("arbitrary",),
            vmem_limit_bytes=vmem_limit),
    )(gi_r, gi_z, gi_n, h0, whh_g, b_hh)

    outputs = out.reshape(S, 1, H)
    new_hidden = h_n.reshape(1, 1, H)
    return outputs, new_hidden


def encoder_forward(token, hidden, params):
    """Single-step forward matching Encoder.forward(input, hidden): returns (output, hidden),
    each (1, 1, H). For multi-token decode, prefer batching tokens through encoder_gru_seq."""
    tokens = jnp.asarray(token, jnp.int32).reshape(1)
    return encoder_gru_seq(tokens, hidden, params)


def encoder_gru_seq_ref(tokens, hidden, raw):
    """Pure-JAX reference mirroring torch nn.Embedding + nn.GRU run step-by-step (raw PyTorch layout)."""
    emb = raw["embedding"].astype(jnp.float32)
    w_ih = raw["w_ih"].astype(jnp.float32)
    w_hh = raw["w_hh"].astype(jnp.float32)
    b_ih = raw["b_ih"].astype(jnp.float32)
    b_hh = raw["b_hh"].astype(jnp.float32)
    H = hidden.shape[-1]
    h = hidden.reshape(1, H).astype(jnp.float32)
    outs = []
    for t in range(tokens.shape[0]):
        x = emb[tokens[t]].reshape(1, H)
        gi = x @ w_ih.T + b_ih
        gh = h @ w_hh.T + b_hh
        r = jax.nn.sigmoid(gi[:, :H] + gh[:, :H])
        z = jax.nn.sigmoid(gi[:, H:2 * H] + gh[:, H:2 * H])
        n = jnp.tanh(gi[:, 2 * H:] + r * gh[:, 2 * H:])
        h = (1.0 - z) * n + z * h
        outs.append(h)
    return jnp.stack(outs, 0), h.reshape(1, 1, H)


def make_params(key, vocab_size, hidden_size):
    """PyTorch-layout parameters (nn.Embedding + nn.GRU weight shapes)."""
    k_emb, k_wih, k_whh, k_bih, k_bhh = jax.random.split(key, 5)
    bound = 1.0 / jnp.sqrt(hidden_size)
    return {
        "embedding": jax.random.normal(k_emb, (vocab_size, hidden_size), jnp.float32),
        "w_ih": jax.random.uniform(k_wih, (3 * hidden_size, hidden_size),
                                   jnp.float32, -bound, bound),
        "w_hh": jax.random.uniform(k_whh, (3 * hidden_size, hidden_size),
                                   jnp.float32, -bound, bound),
        "b_ih": jax.random.uniform(k_bih, (3 * hidden_size,), jnp.float32, -bound, bound),
        "b_hh": jax.random.uniform(k_bhh, (3 * hidden_size,), jnp.float32, -bound, bound),
    }


if __name__ == "__main__":
    vocab_size = 16     # input_size
    hidden_size = 32    # hidden_size
    seq_len = 8

    key = jax.random.PRNGKey(0)
    raw = make_params(key, vocab_size, hidden_size)
    # f32 storage for the tight tolerance check; use dtype=jnp.bfloat16 at production sizes.
    params = prepare_params(raw, dtype=jnp.float32)

    hidden0 = jnp.zeros((1, 1, hidden_size), jnp.float32)   # Encoder.init_hidden()

    # --- single-step forward (exact Encoder.forward semantics) ---
    token = jnp.int32(3)
    out1, hid1 = encoder_forward(token, hidden0, params)
    out1, hid1 = jax.block_until_ready((out1, hid1))
    out1_ref, hid1_ref = encoder_gru_seq_ref(jnp.array([3], jnp.int32), hidden0, raw)
    assert out1.shape == (1, 1, hidden_size) and hid1.shape == (1, 1, hidden_size)
    assert jnp.allclose(out1, out1_ref, atol=1e-4, rtol=1e-4)
    assert jnp.allclose(hid1, hid1_ref, atol=1e-4, rtol=1e-4)

    # --- full sequence: recurrence folded into one pallas_call ---
    tokens = jax.random.randint(jax.random.PRNGKey(1), (seq_len,), 0, vocab_size, jnp.int32)
    outs, hid = encoder_gru_seq(tokens, hidden0, params)
    outs, hid = jax.block_until_ready((outs, hid))
    outs_ref, hid_ref = encoder_gru_seq_ref(tokens, hidden0, raw)
    assert outs.shape == (seq_len, 1, hidden_size) and hid.shape == (1, 1, hidden_size)
    assert jnp.allclose(outs, outs_ref, atol=1e-4, rtol=1e-4)
    assert jnp.allclose(hid, hid_ref, atol=1e-4, rtol=1e-4)

    print("KERNEL_OK")
</pallas_src>

<mosaic_0001>
module attributes {stable_mosaic.version = 11 : i64} {
  func.func @_gru_recurrence_kernel(%arg0: i32, %arg1: memref<1x32xf32, #tpu.memory_space<vmem>>, %arg2: memref<1x32xf32, #tpu.memory_space<vmem>>, %arg3: memref<1x32xf32, #tpu.memory_space<vmem>>, %arg4: memref<1x32xf32, #tpu.memory_space<vmem>>, %arg5: memref<3x32x32xf32, #tpu.memory_space<vmem>>, %arg6: memref<3x32xf32, #tpu.memory_space<vmem>>, %arg7: memref<1x32xf32, #tpu.memory_space<vmem>>, %arg8: memref<1x32xf32, #tpu.memory_space<vmem>>) attributes {dimension_semantics = [#tpu.dimension_semantics<arbitrary>], iteration_bounds = array<i64: 1>, scalar_prefetch = 0 : i64, scratch_operands = 0 : i64, tpu.core_type = #tpu.core_type<tc>, window_params = [{pipeline_mode = #tpu.pipeline_mode<synchronous>, transform_indices = @transform_0, window_bounds = array<i64: 1, 32>}, {pipeline_mode = #tpu.pipeline_mode<synchronous>, transform_indices = @transform_1, window_bounds = array<i64: 1, 32>}, {pipeline_mode = #tpu.pipeline_mode<synchronous>, transform_indices = @transform_2, window_bounds = array<i64: 1, 32>}, {pipeline_mode = #tpu.pipeline_mode<synchronous>, transform_indices = @transform_3, window_bounds = array<i64: 1, 32>}, {pipeline_mode = #tpu.pipeline_mode<synchronous>, transform_indices = @transform_4, window_bounds = array<i64: 3, 32, 32>}, {pipeline_mode = #tpu.pipeline_mode<synchronous>, transform_indices = @transform_5, window_bounds = array<i64: 3, 32>}, {pipeline_mode = #tpu.pipeline_mode<synchronous>, transform_indices = @transform_6, window_bounds = array<i64: 1, 32>}, {pipeline_mode = #tpu.pipeline_mode<synchronous>, transform_indices = @transform_7, window_bounds = array<i64: 1, 32>}]} {
    %c0 = arith.constant 0 : index
    %c0_0 = arith.constant 0 : index
    %0 = vector.load %arg4[%c0, %c0_0] : memref<1x32xf32, #tpu.memory_space<vmem>>, vector<1x32xf32>
    %c0_i32 = arith.constant 0 : i32
    %1 = arith.index_cast %c0_i32 : i32 to index
    %c0_1 = arith.constant 0 : index
    %2 = vector.load %arg1[%1, %c0_1] : memref<1x32xf32, #tpu.memory_space<vmem>>, vector<1x32xf32>
    %3 = arith.index_cast %c0_i32 : i32 to index
    %c0_2 = arith.constant 0 : index
    %4 = vector.load %arg2[%3, %c0_2] : memref<1x32xf32, #tpu.memory_space<vmem>>, vector<1x32xf32>
    %5 = arith.index_cast %c0_i32 : i32 to index
    %c0_3 = arith.constant 0 : index
    %6 = vector.load %arg3[%5, %c0_3] : memref<1x32xf32, #tpu.memory_space<vmem>>, vector<1x32xf32>
    %c0_4 = arith.constant 0 : index
    %c0_5 = arith.constant 0 : index
    %c0_6 = arith.constant 0 : index
    %7 = vector.load %arg5[%c0_4, %c0_5, %c0_6] : memref<3x32x32xf32, #tpu.memory_space<vmem>>, vector<1x32x32xf32>
    %8 = vector.shape_cast %7 : vector<1x32x32xf32> to vector<32x32xf32>
    %cst = arith.constant dense<0.000000e+00> : vector<1x32xf32>
    %9 = tpu.matmul %0, %8, %cst {dimension_numbers = #tpu.dot_dimension_numbers<[1], [0], [0], [1], [0, 0, 1, 1], [], []>} : vector<1x32xf32>, vector<32x32xf32>, vector<1x32xf32> -> vector<1x32xf32>
    %c0_7 = arith.constant 0 : index
    %c0_8 = arith.constant 0 : index
    %10 = vector.load %arg6[%c0_7, %c0_8] : memref<3x32xf32, #tpu.memory_space<vmem>>, vector<1x32xf32>
    %11 = arith.addf %9, %10 : vector<1x32xf32>
    %c1 = arith.constant 1 : index
    %c0_9 = arith.constant 0 : index
    %c0_10 = arith.constant 0 : index
    %12 = vector.load %arg5[%c1, %c0_9, %c0_10] : memref<3x32x32xf32, #tpu.memory_space<vmem>>, vector<1x32x32xf32>
    %13 = vector.shape_cast %12 : vector<1x32x32xf32> to vector<32x32xf32>
    %cst_11 = arith.constant dense<0.000000e+00> : vector<1x32xf32>
    %14 = tpu.matmul %0, %13, %cst_11 {dimension_numbers = #tpu.dot_dimension_numbers<[1], [0], [0], [1], [0, 0, 1, 1], [], []>} : vector<1x32xf32>, vector<32x32xf32>, vector<1x32xf32> -> vector<1x32xf32>
    %c1_12 = arith.constant 1 : index
    %c0_13 = arith.constant 0 : index
    %15 = vector.load %arg6[%c1_12, %c0_13] : memref<3x32xf32, #tpu.memory_space<vmem>>, vector<1x32xf32>
    %16 = arith.addf %14, %15 : vector<1x32xf32>
    %c2 = arith.constant 2 : index
    %c0_14 = arith.constant 0 : index
    %c0_15 = arith.constant 0 : index
    %17 = vector.load %arg5[%c2, %c0_14, %c0_15] : memref<3x32x32xf32, #tpu.memory_space<vmem>>, vector<1x32x32xf32>
    %18 = vector.shape_cast %17 : vector<1x32x32xf32> to vector<32x32xf32>
    %cst_16 = arith.constant dense<0.000000e+00> : vector<1x32xf32>
    %19 = tpu.matmul %0, %18, %cst_16 {dimension_numbers = #tpu.dot_dimension_numbers<[1], [0], [0], [1], [0, 0, 1, 1], [], []>} : vector<1x32xf32>, vector<32x32xf32>, vector<1x32xf32> -> vector<1x32xf32>
    %c2_17 = arith.constant 2 : index
    %c0_18 = arith.constant 0 : index
    %20 = vector.load %arg6[%c2_17, %c0_18] : memref<3x32xf32, #tpu.memory_space<vmem>>, vector<1x32xf32>
    %21 = arith.addf %19, %20 : vector<1x32xf32>
    %22 = arith.addf %2, %11 : vector<1x32xf32>
    %23 = arith.negf %22 : vector<1x32xf32>
    %24 = math.exp %23 : vector<1x32xf32>
    %cst_19 = arith.constant 1.000000e+00 : f32
    %25 = vector.broadcast %cst_19 : f32 to vector<1x32xf32>
    %26 = arith.addf %25, %24 : vector<1x32xf32>
    %27 = arith.divf %25, %26 : vector<1x32xf32>
    %28 = arith.addf %4, %16 : vector<1x32xf32>
    %29 = arith.negf %28 : vector<1x32xf32>
    %30 = math.exp %29 : vector<1x32xf32>
    %cst_20 = arith.constant 1.000000e+00 : f32
    %31 = vector.broadcast %cst_20 : f32 to vector<1x32xf32>
    %32 = arith.addf %31, %30 : vector<1x32xf32>
    %33 = arith.divf %31, %32 : vector<1x32xf32>
    %34 = arith.mulf %27, %21 : vector<1x32xf32>
    %35 = arith.addf %6, %34 : vector<1x32xf32>
    %36 = math.tanh %35 : vector<1x32xf32>
    %cst_21 = arith.constant 1.000000e+00 : f32
    %37 = vector.broadcast %cst_21 : f32 to vector<1x32xf32>
    %38 = arith.subf %37, %33 : vector<1x32xf32>
    %39 = arith.mulf %38, %36 : vector<1x32xf32>
    %40 = arith.mulf %33, %0 : vector<1x32xf32>
    %41 = arith.addf %39, %40 : vector<1x32xf32>
    %42 = arith.index_cast %c0_i32 : i32 to index
    %c0_22 = arith.constant 0 : index
    %43 = vector.load %arg7[%42, %c0_22] : memref<1x32xf32, #tpu.memory_space<vmem>>, vector<1x32xf32>
    tpu.vector_store %arg7[%42, %c0_22], %41 {strides = array<i32>} : memref<1x32xf32, #tpu.memory_space<vmem>>, vector<1x32xf32>,
    %c1_i32 = arith.constant 1 : i32
    %c0_23 = arith.constant 0 : index
    %c0_24 = arith.constant 0 : index
    %44 = vector.load %arg8[%c0_23, %c0_24] : memref<1x32xf32, #tpu.memory_space<vmem>>, vector<1x32xf32>
    tpu.vector_store %arg8[%c0_23, %c0_24], %41 {strides = array<i32>} : memref<1x32xf32, #tpu.memory_space<vmem>>, vector<1x32xf32>,
    return
  }
  func.func @transform_0(%arg0: i32) -> (i32, i32) {
    %c0_i32 = arith.constant 0 : i32
    %c0_i32_0 = arith.constant 0 : i32
    %c0_i32_1 = arith.constant 0 : i32
    return %c0_i32, %c0_i32_0 : i32, i32
  }
  func.func @transform_1(%arg0: i32) -> (i32, i32) {
    %c0_i32 = arith.constant 0 : i32
    %c0_i32_0 = arith.constant 0 : i32
    %c0_i32_1 = arith.constant 0 : i32
    return %c0_i32, %c0_i32_0 : i32, i32
  }
  func.func @transform_2(%arg0: i32) -> (i32, i32) {
    %c0_i32 = arith.constant 0 : i32
    %c0_i32_0 = arith.constant 0 : i32
    %c0_i32_1 = arith.constant 0 : i32
    return %c0_i32, %c0_i32_0 : i32, i32
  }
  func.func @transform_3(%arg0: i32) -> (i32, i32) {
    %c0_i32 = arith.constant 0 : i32
    %c0_i32_0 = arith.constant 0 : i32
    %c0_i32_1 = arith.constant 0 : i32
    return %c0_i32, %c0_i32_0 : i32, i32
  }
  func.func @transform_4(%arg0: i32) -> (i32, i32, i32) {
    %c0_i32 = arith.constant 0 : i32
    %c0_i32_0 = arith.constant 0 : i32
    %c0_i32_1 = arith.constant 0 : i32
    %c0_i32_2 = arith.constant 0 : i32
    return %c0_i32, %c0_i32_0, %c0_i32_1 : i32, i32, i32
  }
  func.func @transform_5(%arg0: i32) -> (i32, i32) {
    %c0_i32 = arith.constant 0 : i32
    %c0_i32_0 = arith.constant 0 : i32
    %c0_i32_1 = arith.constant 0 : i32
    return %c0_i32, %c0_i32_0 : i32, i32
  }
  func.func @transform_6(%arg0: i32) -> (i32, i32) {
    %c0_i32 = arith.constant 0 : i32
    %c0_i32_0 = arith.constant 0 : i32
    %c0_i32_1 = arith.constant 0 : i32
    return %c0_i32, %c0_i32_0 : i32, i32
  }
  func.func @transform_7(%arg0: i32) -> (i32, i32) {
    %c0_i32 = arith.constant 0 : i32
    %c0_i32_0 = arith.constant 0 : i32
    %c0_i32_1 = arith.constant 0 : i32
    return %c0_i32, %c0_i32_0 : i32, i32
  }
}

</mosaic_0001>

<llo_original>
// kernel: encoder_gru_seq.1
$region0: #{encoder_gru_seq.1}
  #allocation0 [shape = 'u32[]', space=smem, size = 0x4, offset = 0x4, fixed_abs, tag = 'smem constant byte address 0x4 - core index']
  #allocation1 [shape = 'u32[144,128]{1,0:T(1,128)}', space=vmem, size = 0x12000, scoped, tag = 'internal scratch']
  %s0 = inlined_call_operand.vmem [shape: f32[1,32], index: 0, kind: input, shape index: {}]
  %s1 = inlined_call_operand.vmem [shape: f32[1,32], index: 1, kind: input, shape index: {}]
  %s2 = inlined_call_operand.vmem [shape: f32[1,32], index: 2, kind: input, shape index: {}]
  %s3 = inlined_call_operand.hbm [shape: f32[1,32], index: 3, kind: input, shape index: {}]
  %s4 = inlined_call_operand.vmem [shape: f32[3,32,32], index: 4, kind: input, shape index: {}]
  %s5 = inlined_call_operand.vmem [shape: f32[3,32], index: 5, kind: input, shape index: {}]
  %s6 = inlined_call_operand.hbm [shape: f32[1,32], index: 6, kind: output, shape index: {0}]
  %s7 = inlined_call_operand.hbm [shape: f32[1,32], index: 7, kind: output, shape index: {1}]
  %8 = xla_tuple %s6, %s7
  %s9 = sld [smem:[#allocation0]]
  $region46: #{encoder_gru_seq.1} parent=0
    _
  %s11 = ssub.s32 1, %s9
  %s12 = scalar_select 0, %s11, %s9
  $region1: #{encoder_gru_seq.1} parent=0
    #allocation2 [shape = 'u8[512]{0}', space=vmem, size = 0x400, scoped, tag = 'input window, operand 3, single buffered']
    #allocation3 [shape = 's32[1]{0}', space=sflag, size = 0x4, scoped, tag = 'scoped memory for encoder_gru_seq.1']
    #allocation4 [shape = 's32[1]{0}', space=sflag, size = 0x4, scoped, tag = 'scoped memory for encoder_gru_seq.1']
    #allocation5 [shape = 'u8[512]{0}', space=vmem, size = 0x400, scoped, tag = 'output window, operand 0, single buffered']
    #allocation6 [shape = 'u8[512]{0}', space=vmem, size = 0x400, scoped, tag = 'output window, operand 1, single buffered']
    #allocation7 [shape = 's32[1]{0}', space=sflag, size = 0x4, scoped, tag = 'scoped memory for encoder_gru_seq.1']
    %13 = vsyncpa [#allocation3], 0
    %14 = vsyncpa [#allocation4], 0
    %15 = vsyncpa [#allocation7], 0
    // Predicated region
    $region2: #{encoder_gru_seq.1} parent=1 // pred_check
      _
    $region3: #{encoder_gru_seq.1} parent=1 // pred_check_branch
      %17 = sbr.rel (0) target = $region5
    $region4: #{encoder_gru_seq.1} parent=1 // pred_region
      _
    $region5: #{encoder_gru_seq.1} parent=1 // pred_fallthru
      _
    // Predicated region
    $region6: #{encoder_gru_seq.1} parent=1 // pred_check
      _
    $region7: #{encoder_gru_seq.1} parent=1 // pred_check_branch
      %19 = sbr.rel (0) target = $region9
    $region8: #{encoder_gru_seq.1} parent=1 // pred_region
      _
    $region9: #{encoder_gru_seq.1} parent=1 // pred_fallthru
      _
    // Predicated region
    $region10: #{encoder_gru_seq.1} parent=1 // pred_check
      _
    $region11: #{encoder_gru_seq.1} parent=1 // pred_check_branch
      %21 = sbr.rel (0) target = $region13
    $region12: #{encoder_gru_seq.1} parent=1 // pred_region
      _
    $region13: #{encoder_gru_seq.1} parent=1 // pred_fallthru
      _
    // Predicated region
    $region14: #{encoder_gru_seq.1} parent=1 // pred_check
      _
    $region15: #{encoder_gru_seq.1} parent=1 // pred_check_branch
      %23 = sbr.rel (0) target = $region17
    $region16: #{encoder_gru_seq.1} parent=1 // pred_region
      %s25 = ssub.s32 16, 16
      %26 = vsyncadd [#allocation3], %s25
      %s28 = sshll.u32 [#allocation2], 4
      %s29 = int_to_ptr.vmem [resolvable:$true] %s28
      %31 = dma.hbm_to_vmem [thread:$0]  %s3, 16, %s29, [#allocation3]
    $region17: #{encoder_gru_seq.1} parent=1 // pred_fallthru
      _
    // Predicated region
    $region18: #{encoder_gru_seq.1} parent=1 // pred_check
      _
    $region19: #{encoder_gru_seq.1} parent=1 // pred_check_branch
      %33 = sbr.rel (0) target = $region21
    $region20: #{encoder_gru_seq.1} parent=1 // pred_region
      _
    $region21: #{encoder_gru_seq.1} parent=1 // pred_fallthru
      _
    // Predicated region
    $region22: #{encoder_gru_seq.1} parent=1 // pred_check
      _
    $region23: #{encoder_gru_seq.1} parent=1 // pred_check_branch
      %35 = sbr.rel (0) target = $region25
    $region24: #{encoder_gru_seq.1} parent=1 // pred_region
      _
    $region25: #{encoder_gru_seq.1} parent=1 // pred_fallthru
      _
    // Predicated region
    $region26: #{encoder_gru_seq.1} parent=1 // pred_check
      _
    $region27: #{encoder_gru_seq.1} parent=1 // pred_check_branch
      %37 = sbr.rel (0) target = $region29
    $region28: #{encoder_gru_seq.1} parent=1 // pred_region
      %38 = dma.done [#allocation3], 16
    $region29: #{encoder_gru_seq.1} parent=1 // pred_fallthru
      _
    %v39 = vld [vmem:[#allocation2] sm:$0x1]
    %v40 = vld [vmem:[%s0] sm:$0x1]
    %v41 = vld [vmem:[%s1] sm:$0x1]
    %v42 = vld [vmem:[%s2] sm:$0x1]
    %v43 = vld [vmem:[%s4] sm:$0xff]
    %v44 = vld [vmem:[%s4 + $0x8] sm:$0xff]
    %v45 = vld [vmem:[%s4 + $0x10] sm:$0xff]
    %v46 = vld [vmem:[%s4 + $0x18] sm:$0xff]
    %v47 = vld [vmem:[%s5] sm:$0x1]
    %vm48 = vcmask 261120
    %v50 = vsel %vm48, %v39, 0
    %52 = vmatprep.subr.mxu0 0.0
    %53 = vmatpush1.msra.mxu0 %v43
    %54 = vmatprep.subr.mxu0 0.0
    %55 = vmatpush1.msra.mxu0 %v44
    %56 = vmatprep.subr.mxu0 0.0
    %57 = vmatpush1.msra.mxu0 %v45
    %58 = vmatprep.subr.mxu0 0.0
    %59 = vmatpush1.msra.mxu0 %v46
    %60 = vmatprep.subr.mxu0 0.0
    %61 = vmatpush1.msra.mxu0 0.0
    %62 = vmatprep.subr.mxu0 0.0
    %63 = vmatpush1.msra.mxu0 0.0
    %64 = vmatprep.subr.mxu0 0.0
    %65 = vmatpush1.msra.mxu0 0.0
    %66 = vmatprep.subr.mxu0 0.0
    %67 = vmatpush1.msra.mxu0 0.0
    %68 = vmatprep.subr.mxu0 0.0
    %69 = vmatpush1.msra.mxu0 0.0
    %70 = vmatprep.subr.mxu0 0.0
    %71 = vmatpush1.msra.mxu0 0.0
    %72 = vmatprep.subr.mxu0 0.0
    %73 = vmatpush1.msra.mxu0 0.0
    %74 = vmatprep.subr.mxu0 0.0
    %75 = vmatpush1.msra.mxu0 0.0
    %76 = vmatprep.subr.mxu0 0.0
    %77 = vmatpush1.msra.mxu0 0.0
    %78 = vmatprep.subr.mxu0 0.0
    %79 = vmatpush1.msra.mxu0 0.0
    %80 = vmatprep.subr.mxu0 0.0
    %81 = vmatpush1.msra.mxu0 0.0
    %82 = vmatprep.subr.mxu0 0.0
    %83 = vmatpush1.msra.mxu0 0.0
    %84 = vmatprep.subr.mxu0 0.0
    %85 = vmatpush1.msra.mxu0 0.0
    %86 = vmatprep.subr.mxu0 0.0
    %87 = vmatpush1.msra.mxu0 0.0
    %88 = vmatprep.subr.mxu0 0.0
    %89 = vmatpush1.msra.mxu0 0.0
    %90 = vmatprep.subr.mxu0 0.0
    %91 = vmatpush1.msra.mxu0 0.0
    %92 = vmatprep.subr.mxu0 0.0
    %93 = vmatpush1.msra.mxu0 0.0
    %94 = vmatprep.subr.mxu0 0.0
    %95 = vmatpush1.msra.mxu0 0.0
    %96 = vmatprep.subr.mxu0 0.0
    %97 = vmatpush1.msra.mxu0 0.0
    %98 = vmatprep.subr.mxu0 0.0
    %99 = vmatpush1.msra.mxu0 0.0
    %100 = vmatprep.subr.mxu0 0.0
    %101 = vmatpush1.msra.mxu0 0.0
    %102 = vmatprep.subr.mxu0 0.0
    %103 = vmatpush1.msra.mxu0 0.0
    %104 = vmatprep.subr.mxu0 0.0
    %105 = vmatpush1.msra.mxu0 0.0
    %106 = vmatprep.subr.mxu0 0.0
    %107 = vmatpush1.msra.mxu0 0.0
    %108 = vmatprep.subr.mxu0 0.0
    %109 = vmatpush1.msra.mxu0 0.0
    %110 = vmatprep.subr.mxu0 0.0
    %111 = vmatpush1.msra.mxu0 0.0
    %112 = vmatprep.subr.mxu0 0.0
    %113 = vmatpush1.msra.mxu0 0.0
    %114 = vmatprep.subr.mxu0 0.0
    %115 = vmatpush1.msra.mxu0 0.0
    %116 = vmatprep.mubr.f32.mxu0 0.0
    %117 = vmatmul.mubr.f32.gmra.mrb[0].mxu0 %v50
    %v118 = vpop.f32.mrb[0].mxu0
    %v119 = vadd.f32 %v47, %v118
    %v120 = vpop.f32.mrb[0].mxu0
    %121 = vdwg.mxu0
    %s122 = scalar_lea.vmem %s4, 32
    %v123 = vld [vmem:[%s122] sm:$0xff]
    %v124 = vld [vmem:[%s122 + $0x8] sm:$0xff]
    %v125 = vld [vmem:[%s122 + $0x10] sm:$0xff]
    %v126 = vld [vmem:[%s122 + $0x18] sm:$0xff]
    %v127 = vld [vmem:[%s5 + $0x1] sm:$0x1]
    %128 = vmatprep.subr.mxu0 0.0
    %129 = vmatpush1.msra.mxu0 %v123
    %130 = vmatprep.subr.mxu0 0.0
    %131 = vmatpush1.msra.mxu0 %v124
    %132 = vmatprep.subr.mxu0 0.0
    %133 = vmatpush1.msra.mxu0 %v125
    %134 = vmatprep.subr.mxu0 0.0
    %135 = vmatpush1.msra.mxu0 %v126
    %136 = vmatprep.subr.mxu0 0.0
    %137 = vmatpush1.msra.mxu0 0.0
    %138 = vmatprep.subr.mxu0 0.0
    %139 = vmatpush1.msra.mxu0 0.0
    %140 = vmatprep.subr.mxu0 0.0
    %141 = vmatpush1.msra.mxu0 0.0
    %142 = vmatprep.subr.mxu0 0.0
    %143 = vmatpush1.msra.mxu0 0.0
    %144 = vmatprep.subr.mxu0 0.0
    %145 = vmatpush1.msra.mxu0 0.0
    %146 = vmatprep.subr.mxu0 0.0
    %147 = vmatpush1.msra.mxu0 0.0
    %148 = vmatprep.subr.mxu0 0.0
    %149 = vmatpush1.msra.mxu0 0.0
    %150 = vmatprep.subr.mxu0 0.0
    %151 = vmatpush1.msra.mxu0 0.0
    %152 = vmatprep.subr.mxu0 0.0
    %153 = vmatpush1.msra.mxu0 0.0
    %154 = vmatprep.subr.mxu0 0.0
    %155 = vmatpush1.msra.mxu0 0.0
    %156 = vmatprep.subr.mxu0 0.0
    %157 = vmatpush1.msra.mxu0 0.0
    %158 = vmatprep.subr.mxu0 0.0
    %159 = vmatpush1.msra.mxu0 0.0
    %160 = vmatprep.subr.mxu0 0.0
    %161 = vmatpush1.msra.mxu0 0.0
    %162 = vmatprep.subr.mxu0 0.0
    %163 = vmatpush1.msra.mxu0 0.0
    %164 = vmatprep.subr.mxu0 0.0
    %165 = vmatpush1.msra.mxu0 0.0
    %166 = vmatprep.subr.mxu0 0.0
    %167 = vmatpush1.msra.mxu0 0.0
    %168 = vmatprep.subr.mxu0 0.0
    %169 = vmatpush1.msra.mxu0 0.0
    %170 = vmatprep.subr.mxu0 0.0
    %171 = vmatpush1.msra.mxu0 0.0
    %172 = vmatprep.subr.mxu0 0.0
    %173 = vmatpush1.msra.mxu0 0.0
    %174 = vmatprep.subr.mxu0 0.0
    %175 = vmatpush1.msra.mxu0 0.0
    %176 = vmatprep.subr.mxu0 0.0
    %177 = vmatpush1.msra.mxu0 0.0
    %178 = vmatprep.subr.mxu0 0.0
    %179 = vmatpush1.msra.mxu0 0.0
    %180 = vmatprep.subr.mxu0 0.0
    %181 = vmatpush1.msra.mxu0 0.0
    %182 = vmatprep.subr.mxu0 0.0
    %183 = vmatpush1.msra.mxu0 0.0
    %184 = vmatprep.subr.mxu0 0.0
    %185 = vmatpush1.msra.mxu0 0.0
    %186 = vmatprep.subr.mxu0 0.0
    %187 = vmatpush1.msra.mxu0 0.0
    %188 = vmatprep.subr.mxu0 0.0
    %189 = vmatpush1.msra.mxu0 0.0
    %190 = vmatprep.subr.mxu0 0.0
    %191 = vmatpush1.msra.mxu0 0.0
    %192 = vmatprep.mubr.f32.mxu0 0.0
    %193 = vmatmul.mubr.f32.gmra.mrb[0].mxu0 %v50
    %v194 = vpop.f32.mrb[0].mxu0
    %v195 = vadd.f32 %v127, %v194
    %v196 = vpop.f32.mrb[0].mxu0
    %197 = vdwg.mxu0
    %s198 = scalar_lea.vmem %s4, 64
    %v199 = vld [vmem:[%s198] sm:$0xff]
    %v200 = vld [vmem:[%s198 + $0x8] sm:$0xff]
    %v201 = vld [vmem:[%s198 + $0x10] sm:$0xff]
    %v202 = vld [vmem:[%s198 + $0x18] sm:$0xff]
    %v203 = vld [vmem:[%s5 + $0x2] sm:$0x1]
    %204 = vmatprep.subr.mxu0 0.0
    %205 = vmatpush1.msra.mxu0 %v199
    %206 = vmatprep.subr.mxu0 0.0
    %207 = vmatpush1.msra.mxu0 %v200
    %208 = vmatprep.subr.mxu0 0.0
    %209 = vmatpush1.msra.mxu0 %v201
    %210 = vmatprep.subr.mxu0 0.0
    %211 = vmatpush1.msra.mxu0 %v202
    %212 = vmatprep.subr.mxu0 0.0
    %213 = vmatpush1.msra.mxu0 0.0
    %214 = vmatprep.subr.mxu0 0.0
    %215 = vmatpush1.msra.mxu0 0.0
    %216 = vmatprep.subr.mxu0 0.0
    %217 = vmatpush1.msra.mxu0 0.0
    %218 = vmatprep.subr.mxu0 0.0
    %219 = vmatpush1.msra.mxu0 0.0
    %220 = vmatprep.subr.mxu0 0.0
    %221 = vmatpush1.msra.mxu0 0.0
    %222 = vmatprep.subr.mxu0 0.0
    %223 = vmatpush1.msra.mxu0 0.0
    %224 = vmatprep.subr.mxu0 0.0
    %225 = vmatpush1.msra.mxu0 0.0
    %226 = vmatprep.subr.mxu0 0.0
    %227 = vmatpush1.msra.mxu0 0.0
    %228 = vmatprep.subr.mxu0 0.0
    %229 = vmatpush1.msra.mxu0 0.0
    %230 = vmatprep.subr.mxu0 0.0
    %231 = vmatpush1.msra.mxu0 0.0
    %232 = vmatprep.subr.mxu0 0.0
    %233 = vmatpush1.msra.mxu0 0.0
    %234 = vmatprep.subr.mxu0 0.0
    %235 = vmatpush1.msra.mxu0 0.0
    %236 = vmatprep.subr.mxu0 0.0
    %237 = vmatpush1.msra.mxu0 0.0
    %238 = vmatprep.subr.mxu0 0.0
    %239 = vmatpush1.msra.mxu0 0.0
    %240 = vmatprep.subr.mxu0 0.0
    %241 = vmatpush1.msra.mxu0 0.0
    %242 = vmatprep.subr.mxu0 0.0
    %243 = vmatpush1.msra.mxu0 0.0
    %244 = vmatprep.subr.mxu0 0.0
    %245 = vmatpush1.msra.mxu0 0.0
    %246 = vmatprep.subr.mxu0 0.0
    %247 = vmatpush1.msra.mxu0 0.0
    %248 = vmatprep.subr.mxu0 0.0
    %249 = vmatpush1.msra.mxu0 0.0
    %250 = vmatprep.subr.mxu0 0.0
    %251 = vmatpush1.msra.mxu0 0.0
    %252 = vmatprep.subr.mxu0 0.0
    %253 = vmatpush1.msra.mxu0 0.0
    %254 = vmatprep.subr.mxu0 0.0
    %255 = vmatpush1.msra.mxu0 0.0
    %256 = vmatprep.subr.mxu0 0.0
    %257 = vmatpush1.msra.mxu0 0.0
    %258 = vmatprep.subr.mxu0 0.0
    %259 = vmatpush1.msra.mxu0 0.0
    %260 = vmatprep.subr.mxu0 0.0
    %261 = vmatpush1.msra.mxu0 0.0
    %262 = vmatprep.subr.mxu0 0.0
    %263 = vmatpush1.msra.mxu0 0.0
    %264 = vmatprep.subr.mxu0 0.0
    %265 = vmatpush1.msra.mxu0 0.0
    %266 = vmatprep.subr.mxu0 0.0
    %267 = vmatpush1.msra.mxu0 0.0
    %268 = vmatprep.mubr.f32.mxu0 0.0
    %269 = vmatmul.mubr.f32.gmra.mrb[0].mxu0 %v50
    %v270 = vpop.f32.mrb[0].mxu0
    %v271 = vadd.f32 %v203, %v270
    %v272 = vpop.f32.mrb[0].mxu0
    %273 = vdwg.mxu0
    %v274 = vadd.f32 %v40, %v119
    %v275 = vxor.u32 %v274, 2147483648
    %v276 = vmul.f32 %v275, 1.442695
    %v277 = vpow.pop %v276
    %v278 = vadd.f32 %v277, 1.0
    %v279 = vrcp.pop %v278
    %v280 = vmul.f32 1.0, %v279
    %v281 = vadd.f32 %v41, %v195
    %v282 = vxor.u32 %v281, 2147483648
    %v283 = vmul.f32 %v282, 1.442695
    %v284 = vpow.pop %v283
    %v285 = vadd.f32 %v284, 1.0
    %v286 = vrcp.pop %v285
    %v287 = vmul.f32 1.0, %v286
    %v288 = vmul.f32 %v280, %v271
    %v289 = vadd.f32 %v42, %v288
    %v290 = vtanh.pop %v289
    %v291 = vsub.f32 1.0, %v287
    %v292 = vmul.f32 %v291, %v290
    %v293 = vmul.f32 %v287, %v39
    %v294 = vadd.f32 %v292, %v293
    %vm295 = vcmask 253952
    %296 = vst.msk [vmem:[#allocation5] sm:$0x1] %vm295, %v294
    %297 = vst.msk [vmem:[#allocation6] sm:$0x1] %vm295, %v294
    // Predicated region
    $region30: #{encoder_gru_seq.1} parent=1 // pred_check
      _
    $region31: #{encoder_gru_seq.1} parent=1 // pred_check_branch
      %299 = sbr.rel (0) target = $region33
    $region32: #{encoder_gru_seq.1} parent=1 // pred_region
      %s301 = ssub.s32 16, 16
      %302 = vsyncadd [#allocation4], %s301
      %s304 = sshll.u32 [#allocation5], 4
      %s305 = int_to_ptr.vmem [resolvable:$true] %s304
      %307 = dma.vmem_to_hbm [thread:$0]  %s305, 16, %s6, [#allocation4]
    $region33: #{encoder_gru_seq.1} parent=1 // pred_fallthru
      _
    // Predicated region
    $region34: #{encoder_gru_seq.1} parent=1 // pred_check
      _
    $region35: #{encoder_gru_seq.1} parent=1 // pred_check_branch
      %309 = sbr.rel (0) target = $region37
    $region36: #{encoder_gru_seq.1} parent=1 // pred_region
      %s311 = ssub.s32 16, 16
      %312 = vsyncadd [#allocation7], %s311
      %s314 = sshll.u32 [#allocation6], 4
      %s315 = int_to_ptr.vmem [resolvable:$true] %s314
      %317 = dma.vmem_to_hbm [thread:$0]  %s315, 16, %s7, [#allocation7]
    $region37: #{encoder_gru_seq.1} parent=1 // pred_fallthru
      _
    // Predicated region
    $region38: #{encoder_gru_seq.1} parent=1 // pred_check
      _
    $region39: #{encoder_gru_seq.1} parent=1 // pred_check_branch
      %319 = sbr.rel (0) target = $region41
    $region40: #{encoder_gru_seq.1} parent=1 // pred_region
      %320 = dma.done [#allocation4], 16
    $region41: #{encoder_gru_seq.1} parent=1 // pred_fallthru
      _
    // Predicated region
    $region42: #{encoder_gru_seq.1} parent=1 // pred_check
      _
    $region43: #{encoder_gru_seq.1} parent=1 // pred_check_branch
      %322 = sbr.rel (0) target = $region45
    $region44: #{encoder_gru_seq.1} parent=1 // pred_region
      %323 = dma.done [#allocation7], 16
    $region45: #{encoder_gru_seq.1} parent=1 // pred_fallthru
      _
    %324 = vsyncpa [#allocation3], 1
    %325 = vsyncpa [#allocation4], 1
    %326 = vsyncpa [#allocation7], 1

</llo_original>
